<compile_context>
chip_gen: v6e
topology: v6e:2x2x1
jax: 0.10.0
libtpu: 0.0.40
codegen_flags: <defaults>
</compile_context>

<pallas_src>
import functools

import jax
import jax.numpy as jnp
from jax import lax
from jax.experimental import pallas as pl
from jax.experimental.pallas import tpu as pltpu


def _norm_kernel(x_ref, o_ref, *, eps, inv_nm1):
    # x_ref: (rt, T) block in VMEM (native dtype); all math in f32.
    xf = x_ref[...].astype(jnp.float32)
    mean = jnp.mean(xf, axis=-1, keepdims=True)                       # (rt, 1)
    centered = xf - mean
    var = jnp.sum(centered * centered, axis=-1, keepdims=True) * inv_nm1
    inv_std = lax.rsqrt(var + eps)          # EUP rsqrt on a tiny (rt, 1) tensor
    o_ref[...] = (centered * inv_std).astype(o_ref.dtype)  # 1 VPU mul / element


def _norm_stats_kernel(x_ref, o_ref, mean_ref, std_ref, *, eps, inv_nm1):
    xf = x_ref[...].astype(jnp.float32)
    mean = jnp.mean(xf, axis=-1, keepdims=True)
    centered = xf - mean
    var = jnp.sum(centered * centered, axis=-1, keepdims=True) * inv_nm1
    inv_std = lax.rsqrt(var + eps)
    o_ref[...] = (centered * inv_std).astype(o_ref.dtype)
    mean_ref[...] = mean
    std_ref[...] = jnp.sqrt(var + eps)


def _round_up(x, m):
    return (x + m - 1) // m * m


def _pick_row_tile(num_rows, t, itemsize, target_bytes=2 * 1024 * 1024):
    """Pick a lane-dense (rt, T) block of roughly target_bytes (v7x-safe)."""
    if num_rows <= 8:
        return num_rows                       # tiny row dim: single full block
    rows = max(8, (target_bytes // max(1, t * itemsize)) // 8 * 8)
    # Keep at least 2 grid steps so the "parallel" axis can split across cores.
    rows = min(rows, _round_up((num_rows + 1) // 2, 8))
    # TODO(synk): for extremely large T (single row block > VMEM budget), tile T
    # with an accumulator pass instead of keeping the full T per block.
    return int(min(rows, 1024))


def instance_norm(x, eps=1e-5, return_mean_std=False):
    """x: (B, C, T) array. Matches AGAIN-VC InstanceNorm.forward."""
    b, c, t = x.shape
    r = b * c
    xr = x.reshape(r, t)                       # free, row-major contiguous
    rt = _pick_row_tile(r, t, x.dtype.itemsize)
    grid = (pl.cdiv(r, rt),)

    # torch.var is unbiased (divide by t-1); t == 1 yields NaN, same as torch.
    inv_nm1 = 1.0 / (t - 1) if t > 1 else float("nan")

    cost = pl.CostEstimate(
        flops=5 * r * t,
        transcendentals=r,
        bytes_accessed=2 * r * t * x.dtype.itemsize + 2 * r * 4,
    )
    cparams = pltpu.CompilerParams(
        dimension_semantics=("parallel",),
        vmem_limit_bytes=48 * 1024 * 1024,
    )
    x_spec = pl.BlockSpec((rt, t), lambda i: (i, 0))
    o_spec = pl.BlockSpec((rt, t), lambda i: (i, 0))

    if not return_mean_std:
        out = pl.pallas_call(
            functools.partial(_norm_kernel, eps=eps, inv_nm1=inv_nm1),
            out_shape=jax.ShapeDtypeStruct((r, t), x.dtype),
            grid=grid,
            in_specs=[x_spec],
            out_specs=o_spec,
            compiler_params=cparams,
            cost_estimate=cost,
        )(xr)
        return out.reshape(b, c, t)

    s_spec = pl.BlockSpec((rt, 1), lambda i: (i, 0))
    out, mean, std = pl.pallas_call(
        functools.partial(_norm_stats_kernel, eps=eps, inv_nm1=inv_nm1),
        out_shape=(
            jax.ShapeDtypeStruct((r, t), x.dtype),
            jax.ShapeDtypeStruct((r, 1), jnp.float32),
            jax.ShapeDtypeStruct((r, 1), jnp.float32),
        ),
        grid=grid,
        in_specs=[x_spec],
        out_specs=(o_spec, s_spec, s_spec),
        compiler_params=cparams,
        cost_estimate=cost,
    )(xr)
    return out.reshape(b, c, t), mean.reshape(b, c, 1), std.reshape(b, c, 1)


def _instance_norm_ref(x, eps=1e-5):
    """Pure-JAX reference mirroring the PyTorch module (unbiased variance)."""
    xf = x.astype(jnp.float32)
    mean = jnp.mean(xf, axis=-1, keepdims=True)
    var = jnp.var(xf, axis=-1, keepdims=True, ddof=1)
    std = jnp.sqrt(var + eps)
    return ((xf - mean) / std).astype(x.dtype), mean, std


if __name__ == "__main__":
    key = jax.random.PRNGKey(0)
    B, C, T = 2, 8, 128  # (b, c, t) as in calc_mean_std's 'b c t' pattern
    x = jax.random.normal(key, (B, C, T), dtype=jnp.float32) * 2.0 + 0.5

    out = instance_norm(x, eps=1e-5)                                # common path
    out2, mean, std = instance_norm(x, eps=1e-5, return_mean_std=True)
    jax.block_until_ready((out, out2, mean, std))

    ref_out, ref_mean, ref_std = _instance_norm_ref(x, eps=1e-5)
    assert jnp.allclose(out, ref_out, atol=1e-5, rtol=1e-5)
    assert jnp.allclose(out2, ref_out, atol=1e-5, rtol=1e-5)
    assert jnp.allclose(mean, ref_mean, atol=1e-5, rtol=1e-5)
    assert jnp.allclose(std, ref_std, atol=1e-5, rtol=1e-5)

    print("KERNEL_OK")
</pallas_src>

<mosaic_0001>
module attributes {stable_mosaic.version = 11 : i64} {
  func.func @_norm_kernel(%arg0: i32, %arg1: memref<8x128xf32, #tpu.memory_space<vmem>>, %arg2: memref<8x128xf32, #tpu.memory_space<vmem>>) attributes {dimension_semantics = [#tpu.dimension_semantics<parallel>], iteration_bounds = array<i64: 2>, scalar_prefetch = 0 : i64, scratch_operands = 0 : i64, tpu.core_type = #tpu.core_type<tc>, window_params = [{transform_indices = @transform_0, window_bounds = array<i64: 8, 128>}, {transform_indices = @transform_1, window_bounds = array<i64: 8, 128>}]} {
    %c0 = arith.constant 0 : index
    %c0_0 = arith.constant 0 : index
    %0 = vector.load %arg1[%c0, %c0_0] : memref<8x128xf32, #tpu.memory_space<vmem>>, vector<8x128xf32>
    %cst = arith.constant dense<0.000000e+00> : vector<8xf32>
    %1 = vector.multi_reduction <add>, %0, %cst [1] : vector<8x128xf32> to vector<8xf32>
    %2 = vector.shape_cast %1 : vector<8xf32> to vector<8x1xf32>
    %cst_1 = arith.constant 1.280000e+02 : f32
    %3 = vector.broadcast %cst_1 : f32 to vector<8x1xf32>
    %4 = arith.divf %2, %3 : vector<8x1xf32>
    %5 = vector.broadcast %4 : vector<8x1xf32> to vector<8x128xf32>
    %6 = arith.subf %0, %5 : vector<8x128xf32>
    %7 = arith.mulf %6, %6 : vector<8x128xf32>
    %cst_2 = arith.constant dense<0.000000e+00> : vector<8xf32>
    %8 = vector.multi_reduction <add>, %7, %cst_2 [1] : vector<8x128xf32> to vector<8xf32>
    %9 = vector.shape_cast %8 : vector<8xf32> to vector<8x1xf32>
    %cst_3 = arith.constant 0.00787401571 : f32
    %10 = vector.broadcast %cst_3 : f32 to vector<8x1xf32>
    %11 = arith.mulf %9, %10 : vector<8x1xf32>
    %cst_4 = arith.constant 9.99999974E-6 : f32
    %12 = vector.broadcast %cst_4 : f32 to vector<8x1xf32>
    %13 = arith.addf %11, %12 : vector<8x1xf32>
    %14 = math.rsqrt %13 : vector<8x1xf32>
    %15 = vector.broadcast %14 : vector<8x1xf32> to vector<8x128xf32>
    %16 = arith.mulf %6, %15 : vector<8x128xf32>
    %c0_5 = arith.constant 0 : index
    %c0_6 = arith.constant 0 : index
    %17 = vector.load %arg2[%c0_5, %c0_6] : memref<8x128xf32, #tpu.memory_space<vmem>>, vector<8x128xf32>
    tpu.vector_store %arg2[%c0_5, %c0_6], %16 {strides = array<i32>} : memref<8x128xf32, #tpu.memory_space<vmem>>, vector<8x128xf32>,
    return
  }
  func.func @transform_0(%arg0: i32) -> (i32, i32) {
    %c0_i32 = arith.constant 0 : i32
    %c0_i32_0 = arith.constant 0 : i32
    return %arg0, %c0_i32 : i32, i32
  }
  func.func @transform_1(%arg0: i32) -> (i32, i32) {
    %c0_i32 = arith.constant 0 : i32
    %c0_i32_0 = arith.constant 0 : i32
    return %arg0, %c0_i32 : i32, i32
  }
}

</mosaic_0001>

<llo_original>
// kernel: tpu_custom_call.1
$region0: #{tpu_custom_call.1}
  #allocation0 [shape = 'u32[]', space=smem, size = 0x4, offset = 0x4, fixed_abs, tag = 'smem constant byte address 0x4 - core index']
  #allocation1 [shape = 'u32[144,128]{1,0:T(1,128)}', space=vmem, size = 0x12000, scoped, tag = 'internal scratch']
  %s0 = inlined_call_operand.hbm [shape: f32[16,128], index: 0, kind: input, shape index: {}]
  %s1 = inlined_call_operand.hbm [shape: f32[16,128], index: 1, kind: output, shape index: {}]
  %s2 = sld [smem:[#allocation0]]
  $region41: #{tpu_custom_call.1} parent=0
    _
  %s4 = ssub.s32 1, %s2
  %s5 = scalar_select 0, %s4, %s2
  $region1: #{tpu_custom_call.1} parent=0
    #allocation2 [shape = 'u8[8192]{0}', space=vmem, size = 0x2000, scoped, tag = 'input window, operand 0']
    #allocation3 [shape = 's32[2]{0}', space=sflag, size = 0x8, scoped, tag = 'scoped memory for tpu_custom_call.1']
    #allocation4 [shape = 's32[2]{0}', space=sflag, size = 0x8, scoped, tag = 'scoped memory for tpu_custom_call.1']
    #allocation5 [shape = 'u8[8192]{0}', space=vmem, size = 0x2000, scoped, tag = 'output window, operand 0']
    %6 = vsyncpa [#allocation3], 0
    %s7 = scalar_lea.sflag [#allocation3], 1
    %8 = vsyncpa %s7, 0
    %9 = vsyncpa [#allocation4], 0
    %s10 = scalar_lea.sflag [#allocation4], 1
    %11 = vsyncpa %s10, 0
    loop: start=0, step=1, limit=4
    $region2: #{tpu_custom_call.1} parent=1 // loop_pre_header
      _
    $region3: #{tpu_custom_call.1} parent=1 // loop_header
      %s13 = sphi 0, %s17
      %p14 = scmp.ge.s32.totalorder %s13, 4
      %s23 = sphi 0, %s25
      %s26 = sphi 0, %s23
      %s27 = sphi 0, %s26
      %s43 = sphi 0, %s27
      %s49 = sphi 0, %s51
      %s52 = sphi 0, %s49
      %s53 = sphi 0, %s52
      %s69 = sphi 0, %s53
    $region4: #{tpu_custom_call.1} parent=1 // loop_header_branch
      %16 = sbr.rel (%p14) target = $region8
    $region5: #{tpu_custom_call.1} parent=1 // loop_body
      %s18 = ssub.s32 %s13, 1
      %s19 = ssub.s32 %s13, 2
      %s20 = sadd.s32 %s13, 1
      %s21 = ssub.s32 %s13, %s20
      %p22 = scmp.eq.s32.totalorder %s21, 0
      %s24 = sadd.s32 %s23, 1
      %s25 = scalar_select %p22, %s23, %s24
      %p28 = pneg %p22
      %p29 = scmp.eq.s32.totalorder %s13, 1
      %p30 = por %p28, %p29
      %p31 = scmp.ne.s32.totalorder %s23, %s26
      %p32 = scmp.eq.s32.totalorder %s13, 0
      %p33 = por %p31, %p32
      %p34 = scmp.ne.s32.totalorder %s23, %s26
      %p35 = scmp.eq.s32.totalorder %s18, 1
      %p36 = por %p34, %p35
      %p37 = scmp.ne.s32.totalorder %s26, %s27
      %p38 = scmp.eq.s32.totalorder %s18, 0
      %p39 = por %p37, %p38
      %p40 = scmp.ne.s32.totalorder %s26, %s27
      %p41 = scmp.eq.s32.totalorder %s19, 1
      %p42 = por %p40, %p41
      %p44 = scmp.ne.s32.totalorder %s27, %s43
      %p45 = scmp.eq.s32.totalorder %s19, 0
      %p46 = por %p44, %p45
      %s47 = ssub.s32 %s13, %s20
      %p48 = scmp.eq.s32.totalorder %s47, 0
      %s50 = sadd.s32 %s49, 1
      %s51 = scalar_select %p48, %s49, %s50
      %p54 = pneg %p48
      %p55 = scmp.eq.s32.totalorder %s13, 1
      %p56 = por %p54, %p55
      %p57 = scmp.ne.s32.totalorder %s49, %s52
      %p58 = scmp.eq.s32.totalorder %s13, 0
      %p59 = por %p57, %p58
      %p60 = scmp.ne.s32.totalorder %s49, %s52
      %p61 = scmp.eq.s32.totalorder %s18, 1
      %p62 = por %p60, %p61
      %p63 = scmp.ne.s32.totalorder %s52, %s53
      %p64 = scmp.eq.s32.totalorder %s18, 0
      %p65 = por %p63, %p64
      %p66 = scmp.ne.s32.totalorder %s52, %s53
      %p67 = scmp.eq.s32.totalorder %s19, 1
      %p68 = por %p66, %p67
      %p70 = scmp.ne.s32.totalorder %s53, %s69
      %p71 = scmp.eq.s32.totalorder %s19, 0
      %p72 = por %p70, %p71
      %p73 = scmp.le.s32.totalorder 1, %s13
      %p74 = scmp.lt.s32.totalorder %s13, 3
      %p75 = pnand %p73, %p74
      %p76 = pneg %p75
      // Predicated region
      $region9: #{tpu_custom_call.1} parent=5 // pred_check
        _
      $region10: #{tpu_custom_call.1} parent=5 // pred_check_branch
        %78 = sbr.rel (%p75) target = $region12
      $region11: #{tpu_custom_call.1} parent=5 // pred_region
        %s79 = ssub.s32 %s13, 1
      $region12: #{tpu_custom_call.1} parent=5 // pred_fallthru
        _
      %p80 = scmp.lt.s32.totalorder %s13, 2
      // Predicated region
      $region13: #{tpu_custom_call.1} parent=5 // pred_check
        %p81 = pneg %p80
      $region14: #{tpu_custom_call.1} parent=5 // pred_check_branch
        %83 = sbr.rel (%p81) target = $region16
      $region15: #{tpu_custom_call.1} parent=5 // pred_region
        // Predicated region
        $region17: #{tpu_custom_call.1} parent=15 // pred_check
          %p84 = pneg %p33
        $region18: #{tpu_custom_call.1} parent=15 // pred_check_branch
          %86 = sbr.rel (%p84) target = $region20
        $region19: #{tpu_custom_call.1} parent=15 // pred_region
          %s87 = sand.u32 %s23, 1
          %s88 = scalar_lea.sflag [#allocation3], %s87
          %s89 = sand.u32 %s23, 1
          %s90 = smul.addr %s89, 8
          %s91 = scalar_lea.vmem [#allocation2], %s90
          %s93 = ssub.s32 128, 128
          %94 = vsyncadd %s88, %s93
          %s95 = smul.addr %s13, 128
          %s96 = scalar_lea.hbm %s0, %s95
          %s98 = sshll.u32 %s91, 4
          %s99 = int_to_ptr.vmem [resolvable:$true] %s98
          %101 = dma.hbm_to_vmem [thread:$0]  %s96, 128, %s99, %s88
        $region20: #{tpu_custom_call.1} parent=15 // pred_fallthru
          _
      $region16: #{tpu_custom_call.1} parent=5 // pred_fallthru
        _
      %p102 = scmp.le.s32.totalorder 1, %s13
      %p103 = scmp.lt.s32.totalorder %s13, 3
      %p104 = pnand %p102, %p103
      %p105 = pneg %p104
      // Predicated region
      $region21: #{tpu_custom_call.1} parent=5 // pred_check
        _
      $region22: #{tpu_custom_call.1} parent=5 // pred_check_branch
        %107 = sbr.rel (%p104) target = $region24
      $region23: #{tpu_custom_call.1} parent=5 // pred_region
        %s108 = ssub.s32 %s13, 1
        %s109 = sand.u32 %s26, 1
        %s110 = scalar_lea.sflag [#allocation3], %s109
        %s111 = sand.u32 %s26, 1
        %s112 = smul.addr %s111, 8
        %s113 = scalar_lea.vmem [#allocation2], %s112
        // Predicated region
        $region25: #{tpu_custom_call.1} parent=23 // pred_check
          %p114 = pneg %p39
        $region26: #{tpu_custom_call.1} parent=23 // pred_check_branch
          %116 = sbr.rel (%p114) target = $region28
        $region27: #{tpu_custom_call.1} parent=23 // pred_region
          %117 = dma.done %s110, 128
        $region28: #{tpu_custom_call.1} parent=23 // pred_fallthru
          _
        %s118 = sand.u32 %s26, 1
        %s119 = scalar_lea.sflag [#allocation3], %s118
        %s120 = sand.u32 %s26, 1
        %s121 = smul.addr %s120, 8
        %s122 = scalar_lea.vmem [#allocation2], %s121
        %p123 = pneg %p39
        %p124 = pneg %p36
        %p125 = pneg %p65
        %p126 = pneg %p62
        %s127 = sand.u32 %s52, 1
        %s128 = scalar_lea.sflag [#allocation4], %s127
        %s129 = sand.u32 %s52, 1
        %s130 = smul.addr %s129, 8
        %s131 = scalar_lea.vmem [#allocation5], %s130
        %v132 = vld [vmem:[%s113] sm:$0xff]
        %133 = vadd.xlane.f32.xlu0 %v132
        %v134 = vpop.xlane.xlu0 %133
        %v135 = vrcp.pop 128.0
        %v136 = vmul.f32 %v134, %v135
        %v137 = vsub.f32 %v132, %v136
        %v138 = vmul.f32 %v137, %v137
        %139 = vadd.xlane.f32.xlu0 %v138
        %v140 = vpop.xlane.xlu0 %139
        %v141 = vmul.f32 %v140, 0.007874016
        %v142 = vadd.f32 %v141, 1e-05
        %v143 = vrsqrt.pop %v142
        %v144 = vmul.f32 %v137, %v143
        %145 = vst [vmem:[%s131] sm:$0xff] %v144
        %s146 = sand.u32 %s52, 1
        %s147 = scalar_lea.sflag [#allocation4], %s146
        %s148 = sand.u32 %s52, 1
        %s149 = smul.addr %s148, 8
        %s150 = scalar_lea.vmem [#allocation5], %s149
        // Predicated region
        $region29: #{tpu_custom_call.1} parent=23 // pred_check
          %p151 = pneg %p62
        $region30: #{tpu_custom_call.1} parent=23 // pred_check_branch
          %153 = sbr.rel (%p151) target = $region32
        $region31: #{tpu_custom_call.1} parent=23 // pred_region
          %s155 = ssub.s32 128, 128
          %156 = vsyncadd %s147, %s155
          %s157 = smul.addr %s18, 128
          %s158 = scalar_lea.hbm %s1, %s157
          %s160 = sshll.u32 %s150, 4
          %s161 = int_to_ptr.vmem [resolvable:$true] %s160
          %163 = dma.vmem_to_hbm [thread:$0]  %s161, 128, %s158, %s147
        $region32: #{tpu_custom_call.1} parent=23 // pred_fallthru
          _
      $region24: #{tpu_custom_call.1} parent=5 // pred_fallthru
        _
      %p164 = scmp.le.s32.totalorder 2, %s13
      // Predicated region
      $region33: #{tpu_custom_call.1} parent=5 // pred_check
        %p165 = pneg %p164
      $region34: #{tpu_custom_call.1} parent=5 // pred_check_branch
        %167 = sbr.rel (%p165) target = $region36
      $region35: #{tpu_custom_call.1} parent=5 // pred_region
        %s168 = ssub.s32 %s13, 2
        // Predicated region
        $region37: #{tpu_custom_call.1} parent=35 // pred_check
          %p169 = pneg %p68
        $region38: #{tpu_custom_call.1} parent=35 // pred_check_branch
          %171 = sbr.rel (%p169) target = $region40
        $region39: #{tpu_custom_call.1} parent=35 // pred_region
          %s172 = sand.u32 %s53, 1
          %s173 = scalar_lea.sflag [#allocation4], %s172
          %s174 = sand.u32 %s53, 1
          %s175 = smul.addr %s174, 8
          %s176 = scalar_lea.vmem [#allocation5], %s175
          %177 = dma.done %s173, 128
        $region40: #{tpu_custom_call.1} parent=35 // pred_fallthru
          _
      $region36: #{tpu_custom_call.1} parent=5 // pred_fallthru
        _
    $region6: #{tpu_custom_call.1} parent=1 // loop_footer
      %s17 = sadd.s32 1, %s13
    $region7: #{tpu_custom_call.1} parent=1 // loop_footer_branch
      %12 = sbr.rel target = $region3
    $region8: #{tpu_custom_call.1} parent=1 // loop_exit
      _
    %178 = vsyncpa [#allocation3], 1
    %s179 = scalar_lea.sflag [#allocation3], 1
    %180 = vsyncpa %s179, 1
    %181 = vsyncpa [#allocation4], 1
    %s182 = scalar_lea.sflag [#allocation4], 1
    %183 = vsyncpa %s182, 1

</llo_original>
